<compile_context>
chip_gen: v7x
topology: tpu7x:2x2x1
jax: 0.10.0
libtpu: 0.0.40
codegen_flags: <defaults>
</compile_context>

<pallas_src>
import functools

import jax
import jax.numpy as jnp
from jax.experimental import pallas as pl
from jax.experimental.pallas import tpu as pltpu


def _round_up(n, m):
    return ((n + m - 1) // m) * m


def _dropout(y, seed_u32, row0_u32, threshold_u32, scale_f32):
    """Counter-based dropout mask: hash(global_row, col, seed) vs. threshold."""
    shape = y.shape
    rows = jax.lax.broadcasted_iota(jnp.int32, shape, 0).astype(jnp.uint32) + row0_u32
    cols = jax.lax.broadcasted_iota(jnp.int32, shape, 1).astype(jnp.uint32)
    h = rows * jnp.uint32(2654435761) + cols * jnp.uint32(0x9E3779B1)
    h = h ^ seed_u32
    # murmur3 finalizer for avalanche
    h = h ^ (h >> 16)
    h = h * jnp.uint32(0x85EBCA6B)
    h = h ^ (h >> 13)
    h = h * jnp.uint32(0xC2B2AE35)
    h = h ^ (h >> 16)
    keep = h >= threshold_u32  # drop with probability p = threshold / 2^32
    return jnp.where(keep, y * scale_f32, jnp.float32(0.0))


def prenet_fused_kernel(seeds_ref, x_ref, *rest, num_layers, tile_rows, dropout_rate):
    """rest = (w_0, b_0, ..., w_{L-1}, b_{L-1}, o_ref). All layers fused."""
    o_ref = rest[-1]
    wb = rest[:-1]

    apply_dropout = dropout_rate > 0.0
    if apply_dropout:
        threshold = jnp.uint32(min(int(round(dropout_rate * 4294967296.0)), 4294967295))
        scale = (jnp.float32(1.0 / (1.0 - dropout_rate))
                 if dropout_rate < 1.0 else jnp.float32(0.0))
        row0 = (pl.program_id(0) * tile_rows).astype(jnp.uint32)

    y = x_ref[...]
    for li in range(num_layers):
        w_ref = wb[2 * li]
        b_ref = wb[2 * li + 1]
        # Linear (MXU, f32 accumulation) + bias + ReLU
        y = jnp.dot(y, w_ref[...], preferred_element_type=jnp.float32)
        y = jnp.maximum(y + b_ref[...], jnp.float32(0.0))
        if apply_dropout:
            y = _dropout(y, seeds_ref[li].astype(jnp.uint32), row0, threshold, scale)
    o_ref[...] = y.astype(o_ref.dtype)


def prenet_forward(x, params, dropout_rate=0.5, seeds=None, tile_rows=512):
    """x: [..., inp_size]; params: list of (w [Din,H], b [1,H]); returns [..., H]."""
    orig_shape = x.shape
    feat = orig_shape[-1]
    x2d = x.reshape(-1, feat).astype(jnp.float32)
    N = x2d.shape[0]
    H = params[-1][0].shape[1]
    num_layers = len(params)

    if seeds is None:
        seeds = jnp.arange(num_layers, dtype=jnp.int32)
    seeds = jnp.asarray(seeds, dtype=jnp.int32)

    # Row tiling: multiple of 8 (sublane), padded so every tile is full.
    tm = min(tile_rows, _round_up(N, 8))
    n_pad = _round_up(N, tm)
    if n_pad != N:
        x2d = jnp.pad(x2d, ((0, n_pad - N), (0, 0)))

    # Block specs: x/out tiled over rows; weights/biases fully VMEM-resident.
    in_specs = [pl.BlockSpec((tm, feat), lambda i, s: (i, 0))]
    flat_wb = []
    for (w, b) in params:
        in_specs.append(pl.BlockSpec(w.shape, lambda i, s: (0, 0)))
        in_specs.append(pl.BlockSpec(b.shape, lambda i, s: (0, 0)))
        flat_wb.extend([w, b])
    out_specs = pl.BlockSpec((tm, H), lambda i, s: (i, 0))

    # Cost hint for XLA scheduling around the kernel.
    flops = 0
    bytes_accessed = 4 * (n_pad * feat + n_pad * H)
    for (w, b) in params:
        flops += 2 * n_pad * w.shape[0] * w.shape[1]
        bytes_accessed += 4 * (w.size + b.size)

    kernel = functools.partial(
        prenet_fused_kernel,
        num_layers=num_layers,
        tile_rows=tm,
        dropout_rate=float(dropout_rate),
    )

    out = pl.pallas_call(
        kernel,
        out_shape=jax.ShapeDtypeStruct((n_pad, H), jnp.float32),
        grid_spec=pltpu.PrefetchScalarGridSpec(
            num_scalar_prefetch=1,            # per-layer dropout seeds -> SMEM
            grid=(n_pad // tm,),
            in_specs=in_specs,
            out_specs=out_specs,
        ),
        compiler_params=pltpu.CompilerParams(
            dimension_semantics=("parallel",),  # row tiles independent (v7x 2 TCs)
        ),
        cost_estimate=pl.CostEstimate(
            flops=int(flops), transcendentals=0, bytes_accessed=int(bytes_accessed)
        ),
    )(seeds, x2d, *flat_wb)

    out = out[:N]
    return out.reshape(orig_shape[:-1] + (H,))


def init_prenet_params(key, inp_size, num_layers=2, hidden_size=256):
    """nn.Linear default init: U(-1/sqrt(fan_in), 1/sqrt(fan_in))."""
    params = []
    for i in range(num_layers):
        size_in = inp_size if i == 0 else hidden_size
        key, kw, kb = jax.random.split(key, 3)
        bound = 1.0 / float(size_in) ** 0.5
        w = jax.random.uniform(kw, (size_in, hidden_size), jnp.float32, -bound, bound)
        b = jax.random.uniform(kb, (1, hidden_size), jnp.float32, -bound, bound)
        params.append((w, b))
    return params


def _prenet_reference_no_dropout(x, params):
    y = x.reshape(-1, x.shape[-1])
    for w, b in params:
        y = jnp.maximum(y @ w + b, 0.0)
    return y.reshape(x.shape[:-1] + (params[-1][0].shape[1],))


if __name__ == "__main__":
    B, T, INP, HID, LAYERS = 2, 8, 32, 256, 2
    key = jax.random.PRNGKey(0)
    kx, kp = jax.random.split(key)
    x = jax.random.normal(kx, (B, T, INP), dtype=jnp.float32)
    params = init_prenet_params(kp, INP, num_layers=LAYERS, hidden_size=HID)

    # 1) Numerics check of the fused Linear+ReLU path (dropout disabled).
    out_nd = prenet_forward(x, params, dropout_rate=0.0)
    out_nd = jax.block_until_ready(out_nd)
    ref_nd = _prenet_reference_no_dropout(x, params)
    assert out_nd.shape == (B, T, HID), out_nd.shape
    assert jnp.allclose(out_nd, ref_nd, atol=1e-4, rtol=1e-4), "mismatch vs reference"

    # 2) Full training-mode forward (dropout p=0.5, deterministic seeds).
    out = prenet_forward(x, params, dropout_rate=0.5,
                         seeds=jnp.array([1234, 1235], dtype=jnp.int32))
    out = jax.block_until_ready(out)
    assert out.shape == (B, T, HID), out.shape
    assert bool(jnp.all(jnp.isfinite(out)))

    print("KERNEL_OK")
</pallas_src>

<mosaic_0001>
module attributes {stable_mosaic.version = 11 : i64} {
  func.func @prenet_fused_kernel(%arg0: i32, %arg1: memref<2xi32, #tpu.memory_space<smem>>, %arg2: memref<16x32xf32, #tpu.memory_space<vmem>>, %arg3: memref<32x256xf32, #tpu.memory_space<vmem>>, %arg4: memref<1x256xf32, #tpu.memory_space<vmem>>, %arg5: memref<256x256xf32, #tpu.memory_space<vmem>>, %arg6: memref<1x256xf32, #tpu.memory_space<vmem>>, %arg7: memref<16x256xf32, #tpu.memory_space<vmem>>) attributes {dimension_semantics = [#tpu.dimension_semantics<parallel>], iteration_bounds = array<i64: 1>, scalar_prefetch = 1 : i64, scratch_operands = 0 : i64, tpu.core_type = #tpu.core_type<tc>, window_params = [{transform_indices = @transform_0, window_bounds = array<i64: 16, 32>}, {pipeline_mode = #tpu.pipeline_mode<synchronous>, transform_indices = @transform_1, window_bounds = array<i64: 32, 256>}, {pipeline_mode = #tpu.pipeline_mode<synchronous>, transform_indices = @transform_2, window_bounds = array<i64: 1, 256>}, {pipeline_mode = #tpu.pipeline_mode<synchronous>, transform_indices = @transform_3, window_bounds = array<i64: 256, 256>}, {pipeline_mode = #tpu.pipeline_mode<synchronous>, transform_indices = @transform_4, window_bounds = array<i64: 1, 256>}, {transform_indices = @transform_5, window_bounds = array<i64: 16, 256>}]} {
    %c0 = arith.constant 0 : index
    %c0_0 = arith.constant 0 : index
    %0 = vector.load %arg2[%c0, %c0_0] : memref<16x32xf32, #tpu.memory_space<vmem>>, vector<16x32xf32>
    %c0_1 = arith.constant 0 : index
    %c0_2 = arith.constant 0 : index
    %1 = vector.load %arg3[%c0_1, %c0_2] : memref<32x256xf32, #tpu.memory_space<vmem>>, vector<32x256xf32>
    %cst = arith.constant dense<0.000000e+00> : vector<16x256xf32>
    %2 = tpu.matmul %0, %1, %cst {dimension_numbers = #tpu.dot_dimension_numbers<[1], [0], [0], [1], [0, 0, 1, 1], [], []>} : vector<16x32xf32>, vector<32x256xf32>, vector<16x256xf32> -> vector<16x256xf32>
    %c0_3 = arith.constant 0 : index
    %c0_4 = arith.constant 0 : index
    %3 = vector.load %arg4[%c0_3, %c0_4] : memref<1x256xf32, #tpu.memory_space<vmem>>, vector<1x256xf32>
    %4 = vector.broadcast %3 : vector<1x256xf32> to vector<16x256xf32>
    %5 = arith.addf %2, %4 : vector<16x256xf32>
    %cst_5 = arith.constant 0.000000e+00 : f32
    %6 = vector.broadcast %cst_5 : f32 to vector<16x256xf32>
    %7 = arith.maximumf %5, %6 : vector<16x256xf32>
    %c0_6 = arith.constant 0 : index
    %c0_7 = arith.constant 0 : index
    %8 = vector.load %arg5[%c0_6, %c0_7] : memref<256x256xf32, #tpu.memory_space<vmem>>, vector<256x256xf32>
    %cst_8 = arith.constant dense<0.000000e+00> : vector<16x256xf32>
    %9 = tpu.matmul %7, %8, %cst_8 {dimension_numbers = #tpu.dot_dimension_numbers<[1], [0], [0], [1], [0, 0, 1, 1], [], []>} : vector<16x256xf32>, vector<256x256xf32>, vector<16x256xf32> -> vector<16x256xf32>
    %c0_9 = arith.constant 0 : index
    %c0_10 = arith.constant 0 : index
    %10 = vector.load %arg6[%c0_9, %c0_10] : memref<1x256xf32, #tpu.memory_space<vmem>>, vector<1x256xf32>
    %11 = vector.broadcast %10 : vector<1x256xf32> to vector<16x256xf32>
    %12 = arith.addf %9, %11 : vector<16x256xf32>
    %cst_11 = arith.constant 0.000000e+00 : f32
    %13 = vector.broadcast %cst_11 : f32 to vector<16x256xf32>
    %14 = arith.maximumf %12, %13 : vector<16x256xf32>
    %c0_12 = arith.constant 0 : index
    %c0_13 = arith.constant 0 : index
    %15 = vector.load %arg7[%c0_12, %c0_13] : memref<16x256xf32, #tpu.memory_space<vmem>>, vector<16x256xf32>
    tpu.vector_store %arg7[%c0_12, %c0_13], %14 {strides = array<i32>} : memref<16x256xf32, #tpu.memory_space<vmem>>, vector<16x256xf32>,
    return
  }
  func.func @transform_0(%arg0: i32, %arg1: memref<2xi32, #tpu.memory_space<smem>>) -> (i32, i32) {
    %c0_i32 = arith.constant 0 : i32
    %c0_i32_0 = arith.constant 0 : i32
    return %arg0, %c0_i32 : i32, i32
  }
  func.func @transform_1(%arg0: i32, %arg1: memref<2xi32, #tpu.memory_space<smem>>) -> (i32, i32) {
    %c0_i32 = arith.constant 0 : i32
    %c0_i32_0 = arith.constant 0 : i32
    %c0_i32_1 = arith.constant 0 : i32
    return %c0_i32, %c0_i32_0 : i32, i32
  }
  func.func @transform_2(%arg0: i32, %arg1: memref<2xi32, #tpu.memory_space<smem>>) -> (i32, i32) {
    %c0_i32 = arith.constant 0 : i32
    %c0_i32_0 = arith.constant 0 : i32
    %c0_i32_1 = arith.constant 0 : i32
    return %c0_i32, %c0_i32_0 : i32, i32
  }
  func.func @transform_3(%arg0: i32, %arg1: memref<2xi32, #tpu.memory_space<smem>>) -> (i32, i32) {
    %c0_i32 = arith.constant 0 : i32
    %c0_i32_0 = arith.constant 0 : i32
    %c0_i32_1 = arith.constant 0 : i32
    return %c0_i32, %c0_i32_0 : i32, i32
  }
  func.func @transform_4(%arg0: i32, %arg1: memref<2xi32, #tpu.memory_space<smem>>) -> (i32, i32) {
    %c0_i32 = arith.constant 0 : i32
    %c0_i32_0 = arith.constant 0 : i32
    %c0_i32_1 = arith.constant 0 : i32
    return %c0_i32, %c0_i32_0 : i32, i32
  }
  func.func @transform_5(%arg0: i32, %arg1: memref<2xi32, #tpu.memory_space<smem>>) -> (i32, i32) {
    %c0_i32 = arith.constant 0 : i32
    %c0_i32_0 = arith.constant 0 : i32
    return %arg0, %c0_i32 : i32, i32
  }
}

</mosaic_0001>

<llo_original>
// kernel: tpu_custom_call.1
$region0: #{tpu_custom_call.1}
  #allocation0 [shape = 'u32[]', space=smem, size = 0x4, offset = 0x4, fixed_abs, tag = 'smem constant byte address 0x4 - core index']
  #allocation1 [shape = 'u32[144,128]{1,0:T(1,128)}', space=vmem, size = 0x12000, scoped, tag = 'internal scratch']
  #allocation2 [shape = 's32[1]{0}', space=sflag, size = 0x4, scoped, tag = 'scoped memory for tpu_custom_call.1']
  #allocation3 [shape = 'u8[512]{0}', space=smem, size = 0x200, scoped, tag = 'prefetched SMEM operand 0']
  %s0 = inlined_call_operand.hbm [shape: s32[2], index: 0, kind: input, shape index: {}]
  %s1 = inlined_call_operand.hbm [shape: f32[16,32], index: 1, kind: input, shape index: {}]
  %s2 = inlined_call_operand.hbm [shape: f32[32,256], index: 2, kind: input, shape index: {}]
  %s3 = inlined_call_operand.vmem [shape: f32[1,256], index: 3, kind: input, shape index: {}]
  %s4 = inlined_call_operand.hbm [shape: f32[256,256], index: 4, kind: input, shape index: {}]
  %s5 = inlined_call_operand.vmem [shape: f32[1,256], index: 5, kind: input, shape index: {}]
  %s6 = inlined_call_operand.hbm [shape: f32[16,256], index: 6, kind: output, shape index: {}]
  %s7 = sld [smem:[#allocation0]]
  $region42: #{tpu_custom_call.1} parent=0
    _
  %s9 = ssub.s32 1, %s7
  %s10 = scalar_select 0, %s9, %s7
  %12 = dma.hbm_to_smem %s0, 16, [#allocation3], [#allocation2]
  %13 = dma.done [#allocation2], 16
  %14 = sfence
  $region1: #{tpu_custom_call.1} parent=0
    #allocation4 [shape = 'u8[8192]{0}', space=vmem, size = 0x2000, scoped, tag = 'input window, operand 1, single buffered']
    #allocation5 [shape = 's32[1]{0}', space=sflag, size = 0x4, scoped, tag = 'scoped memory for tpu_custom_call.1']
    #allocation6 [shape = 's32[1]{0}', space=sflag, size = 0x4, scoped, tag = 'scoped memory for tpu_custom_call.1']
    #allocation7 [shape = 'u8[32768]{0}', space=vmem, size = 0x8000, scoped, tag = 'input window, operand 2, single buffered']
    #allocation8 [shape = 's32[1]{0}', space=sflag, size = 0x4, scoped, tag = 'scoped memory for tpu_custom_call.1']
    #allocation9 [shape = 'u8[262144]{0}', space=vmem, size = 0x40000, scoped, tag = 'input window, operand 4, single buffered']
    #allocation10 [shape = 'u8[16384]{0}', space=vmem, size = 0x4000, scoped, tag = 'output window, operand 0, single buffered']
    %15 = vsyncpa [#allocation5], 0
    %16 = vsyncpa [#allocation8], 0
    %17 = vsyncpa [#allocation6], 0
    // Predicated region
    $region2: #{tpu_custom_call.1} parent=1 // pred_check
      _
    $region3: #{tpu_custom_call.1} parent=1 // pred_check_branch
      %19 = sbr.rel (0) target = $region5
    $region4: #{tpu_custom_call.1} parent=1 // pred_region
      %s21 = ssub.s32 256, 256
      %22 = vsyncadd [#allocation5], %s21
      %s23 = sshll.u32 [#allocation4], 4
      %s24 = int_to_ptr.vmem [resolvable:$true] %s23
      %29 = dma.hbm_to_vmem [thread:$0]  %s1, 256, %s24, [#allocation5], 128, 128, 8
    $region5: #{tpu_custom_call.1} parent=1 // pred_fallthru
      _
    // Predicated region
    $region6: #{tpu_custom_call.1} parent=1 // pred_check
      _
    $region7: #{tpu_custom_call.1} parent=1 // pred_check_branch
      %31 = sbr.rel (0) target = $region9
    $region8: #{tpu_custom_call.1} parent=1 // pred_region
      %s33 = ssub.s32 1024, 1024
      %34 = vsyncadd [#allocation8], %s33
      %s35 = sshll.u32 [#allocation7], 4
      %s36 = int_to_ptr.vmem [resolvable:$true] %s35
      %41 = dma.hbm_to_vmem [thread:$0]  %s2, 1024, %s36, [#allocation8], 256, 256, 16
    $region9: #{tpu_custom_call.1} parent=1 // pred_fallthru
      _
    // Predicated region
    $region10: #{tpu_custom_call.1} parent=1 // pred_check
      _
    $region11: #{tpu_custom_call.1} parent=1 // pred_check_branch
      %43 = sbr.rel (0) target = $region13
    $region12: #{tpu_custom_call.1} parent=1 // pred_region
      _
    $region13: #{tpu_custom_call.1} parent=1 // pred_fallthru
      _
    // Predicated region
    $region14: #{tpu_custom_call.1} parent=1 // pred_check
      _
    $region15: #{tpu_custom_call.1} parent=1 // pred_check_branch
      %45 = sbr.rel (0) target = $region17
    $region16: #{tpu_custom_call.1} parent=1 // pred_region
      %s47 = ssub.s32 8192, 8192
      %48 = vsyncadd [#allocation8], %s47
      %s49 = sshll.u32 [#allocation9], 4
      %s50 = int_to_ptr.vmem [resolvable:$true] %s49
      %55 = dma.hbm_to_vmem [thread:$0]  %s4, 8192, %s50, [#allocation8], 256, 256, 16
    $region17: #{tpu_custom_call.1} parent=1 // pred_fallthru
      _
    // Predicated region
    $region18: #{tpu_custom_call.1} parent=1 // pred_check
      _
    $region19: #{tpu_custom_call.1} parent=1 // pred_check_branch
      %57 = sbr.rel (0) target = $region21
    $region20: #{tpu_custom_call.1} parent=1 // pred_region
      _
    $region21: #{tpu_custom_call.1} parent=1 // pred_fallthru
      _
    // Predicated region
    $region22: #{tpu_custom_call.1} parent=1 // pred_check
      _
    $region23: #{tpu_custom_call.1} parent=1 // pred_check_branch
      %59 = sbr.rel (0) target = $region25
    $region24: #{tpu_custom_call.1} parent=1 // pred_region
      %60 = dma.done [#allocation5], 256
    $region25: #{tpu_custom_call.1} parent=1 // pred_fallthru
      _
    // Predicated region
    $region26: #{tpu_custom_call.1} parent=1 // pred_check
      _
    $region27: #{tpu_custom_call.1} parent=1 // pred_check_branch
      %62 = sbr.rel (0) target = $region29
    $region28: #{tpu_custom_call.1} parent=1 // pred_region
      %63 = dma.done [#allocation8], 1024
    $region29: #{tpu_custom_call.1} parent=1 // pred_fallthru
      _
    // Predicated region
    $region30: #{tpu_custom_call.1} parent=1 // pred_check
      _
    $region31: #{tpu_custom_call.1} parent=1 // pred_check_branch
      %65 = sbr.rel (0) target = $region33
    $region32: #{tpu_custom_call.1} parent=1 // pred_region
      %66 = dma.done [#allocation8], 8192
    $region33: #{tpu_custom_call.1} parent=1 // pred_fallthru
      _
    %v67 = vld [vmem:[#allocation4] sm:$0xff]
    %v68 = vld [vmem:[#allocation4 + $0x8] sm:$0xff]
    %v69 = vld [vmem:[#allocation7] sm:$0xff]
    %v70 = vld [vmem:[#allocation7 + $0x8] sm:$0xff]
    %v71 = vld [vmem:[#allocation7 + $0x10] sm:$0xff]
    %v72 = vld [vmem:[#allocation7 + $0x18] sm:$0xff]
    %v73 = vld [vmem:[#allocation7 + $0x20] sm:$0xff]
    %v74 = vld [vmem:[#allocation7 + $0x28] sm:$0xff]
    %v75 = vld [vmem:[#allocation7 + $0x30] sm:$0xff]
    %v76 = vld [vmem:[#allocation7 + $0x38] sm:$0xff]
    %v77 = vld [vmem:[%s3] sm:$0x3]
    %v79 = vlaneseq
    %v80 = vshrl.u32 %v79, 7
    %v81 = vsub.s32 0, %v80
    %v82 = vrot.slane %v77, %v81
    %v83 = vlaneseq
    %v84 = vshrl.u32 %v83, 7
    %v85 = vsub.s32 1, %v84
    %v86 = vrot.slane %v77, %v85
    %vm89 = vcmask 261120
    %v91 = vsel %vm89, %v67, 0
    %v94 = vsel %vm89, %v68, 0
    %96 = vmatprep.subr.mxu0 %v70
    %97 = vmatpush1.msra.mxu0 %v69
    %98 = vmatprep.subr.mxu0 %v72
    %99 = vmatpush1.msra.mxu0 %v71
    %100 = vmatprep.subr.mxu0 %v74
    %101 = vmatpush1.msra.mxu0 %v73
    %102 = vmatprep.subr.mxu0 %v76
    %103 = vmatpush1.msra.mxu0 %v75
    %104 = vmatprep.subr.mxu0 0.0
    %105 = vmatpush1.msra.mxu0 0.0
    %106 = vmatprep.subr.mxu0 0.0
    %107 = vmatpush1.msra.mxu0 0.0
    %108 = vmatprep.subr.mxu0 0.0
    %109 = vmatpush1.msra.mxu0 0.0
    %110 = vmatprep.subr.mxu0 0.0
    %111 = vmatpush1.msra.mxu0 0.0
    %112 = vmatprep.subr.mxu0 0.0
    %113 = vmatpush1.msra.mxu0 0.0
    %114 = vmatprep.subr.mxu0 0.0
    %115 = vmatpush1.msra.mxu0 0.0
    %116 = vmatprep.subr.mxu0 0.0
    %117 = vmatpush1.msra.mxu0 0.0
    %118 = vmatprep.subr.mxu0 0.0
    %119 = vmatpush1.msra.mxu0 0.0
    %120 = vmatprep.subr.mxu0 0.0
    %121 = vmatpush1.msra.mxu0 0.0
    %122 = vmatprep.subr.mxu0 0.0
    %123 = vmatpush1.msra.mxu0 0.0
    %124 = vmatprep.subr.mxu0 0.0
    %125 = vmatpush1.msra.mxu0 0.0
    %126 = vmatprep.subr.mxu0 0.0
    %127 = vmatpush1.msra.mxu0 0.0
    %128 = vmatprep.subr.mxu0 0.0
    %129 = vmatpush1.msra.mxu0 0.0
    %130 = vmatprep.subr.mxu0 0.0
    %131 = vmatpush1.msra.mxu0 0.0
    %132 = vmatprep.subr.mxu0 0.0
    %133 = vmatpush1.msra.mxu0 0.0
    %134 = vmatprep.subr.mxu0 0.0
    %135 = vmatpush1.msra.mxu0 0.0
    %136 = vmatprep.subr.mxu0 0.0
    %137 = vmatpush1.msra.mxu0 0.0
    %138 = vmatprep.subr.mxu0 0.0
    %139 = vmatpush1.msra.mxu0 0.0
    %140 = vmatprep.subr.mxu0 0.0
    %141 = vmatpush1.msra.mxu0 0.0
    %142 = vmatprep.subr.mxu0 0.0
    %143 = vmatpush1.msra.mxu0 0.0
    %144 = vmatprep.subr.mxu0 0.0
    %145 = vmatpush1.msra.mxu0 0.0
    %146 = vmatprep.subr.mxu0 0.0
    %147 = vmatpush1.msra.mxu0 0.0
    %148 = vmatprep.subr.mxu0 0.0
    %149 = vmatpush1.msra.mxu0 0.0
    %150 = vmatprep.subr.mxu0 0.0
    %151 = vmatpush1.msra.mxu0 0.0
    %152 = vmatprep.subr.mxu0 0.0
    %153 = vmatpush1.msra.mxu0 0.0
    %154 = vmatprep.subr.mxu0 0.0
    %155 = vmatpush1.msra.mxu0 0.0
    %156 = vmatprep.subr.mxu0 0.0
    %157 = vmatpush1.msra.mxu0 0.0
    %158 = vmatprep.subr.mxu0 0.0
    %159 = vmatpush1.msra.mxu0 0.0
    %160 = vmatprep.mubr.f32.mxu0 0.0
    %161 = vmatmul.mubr.f32.gmra.mrb[0].mxu0 %v91
    %v162 = vpop.f32.mrb[0].mxu0
    %v163 = vadd.f32 %v82, %v162
    %v164 = vpop.f32.mrb[0].mxu0
    %v165 = vadd.f32 %v86, %v164
    %166 = vmatprep.mubr.f32.mxu0 0.0
    %167 = vmatmul.mubr.f32.gmra.mrb[0].mxu0 %v94
    %v168 = vpop.f32.mrb[0].mxu0
    %v169 = vadd.f32 %v82, %v168
    %v170 = vpop.f32.mrb[0].mxu0
    %v171 = vadd.f32 %v86, %v170
    %172 = vdwg.mxu0
    %v173 = vmax.f32 %v163, 0.0
    %v174 = vmax.f32 %v165, 0.0
    %v175 = vmax.f32 %v169, 0.0
    %v176 = vmax.f32 %v171, 0.0
    %v177 = vld [vmem:[#allocation9] sm:$0xff]
    %v178 = vld [vmem:[#allocation9 + $0x8] sm:$0xff]
    %v179 = vld [vmem:[#allocation9 + $0x10] sm:$0xff]
    %v180 = vld [vmem:[#allocation9 + $0x18] sm:$0xff]
    %v181 = vld [vmem:[#allocation9 + $0x20] sm:$0xff]
    %v182 = vld [vmem:[#allocation9 + $0x28] sm:$0xff]
    %v183 = vld [vmem:[#allocation9 + $0x30] sm:$0xff]
    %v184 = vld [vmem:[#allocation9 + $0x38] sm:$0xff]
    %v185 = vld [vmem:[#allocation9 + $0x40] sm:$0xff]
    %v186 = vld [vmem:[#allocation9 + $0x48] sm:$0xff]
    %v187 = vld [vmem:[#allocation9 + $0x50] sm:$0xff]
    %v188 = vld [vmem:[#allocation9 + $0x58] sm:$0xff]
    %v189 = vld [vmem:[#allocation9 + $0x60] sm:$0xff]
    %v190 = vld [vmem:[#allocation9 + $0x68] sm:$0xff]
    %v191 = vld [vmem:[#allocation9 + $0x70] sm:$0xff]
    %v192 = vld [vmem:[#allocation9 + $0x78] sm:$0xff]
    %v193 = vld [vmem:[#allocation9 + $0x80] sm:$0xff]
    %v194 = vld [vmem:[#allocation9 + $0x88] sm:$0xff]
    %v195 = vld [vmem:[#allocation9 + $0x90] sm:$0xff]
    %v196 = vld [vmem:[#allocation9 + $0x98] sm:$0xff]
    %v197 = vld [vmem:[#allocation9 + $0xa0] sm:$0xff]
    %v198 = vld [vmem:[#allocation9 + $0xa8] sm:$0xff]
    %v199 = vld [vmem:[#allocation9 + $0xb0] sm:$0xff]
    %v200 = vld [vmem:[#allocation9 + $0xb8] sm:$0xff]
    %v201 = vld [vmem:[#allocation9 + $0xc0] sm:$0xff]
    %v202 = vld [vmem:[#allocation9 + $0xc8] sm:$0xff]
    %v203 = vld [vmem:[#allocation9 + $0xd0] sm:$0xff]
    %v204 = vld [vmem:[#allocation9 + $0xd8] sm:$0xff]
    %v205 = vld [vmem:[#allocation9 + $0xe0] sm:$0xff]
    %v206 = vld [vmem:[#allocation9 + $0xe8] sm:$0xff]
    %v207 = vld [vmem:[#allocation9 + $0xf0] sm:$0xff]
    %v208 = vld [vmem:[#allocation9 + $0xf8] sm:$0xff]
    %v209 = vld [vmem:[#allocation9 + $0x100] sm:$0xff]
    %v210 = vld [vmem:[#allocation9 + $0x108] sm:$0xff]
    %v211 = vld [vmem:[#allocation9 + $0x110] sm:$0xff]
    %v212 = vld [vmem:[#allocation9 + $0x118] sm:$0xff]
    %v213 = vld [vmem:[#allocation9 + $0x120] sm:$0xff]
    %v214 = vld [vmem:[#allocation9 + $0x128] sm:$0xff]
    %v215 = vld [vmem:[#allocation9 + $0x130] sm:$0xff]
    %v216 = vld [vmem:[#allocation9 + $0x138] sm:$0xff]
    %v217 = vld [vmem:[#allocation9 + $0x140] sm:$0xff]
    %v218 = vld [vmem:[#allocation9 + $0x148] sm:$0xff]
    %v219 = vld [vmem:[#allocation9 + $0x150] sm:$0xff]
    %v220 = vld [vmem:[#allocation9 + $0x158] sm:$0xff]
    %v221 = vld [vmem:[#allocation9 + $0x160] sm:$0xff]
    %v222 = vld [vmem:[#allocation9 + $0x168] sm:$0xff]
    %v223 = vld [vmem:[#allocation9 + $0x170] sm:$0xff]
    %v224 = vld [vmem:[#allocation9 + $0x178] sm:$0xff]
    %v225 = vld [vmem:[#allocation9 + $0x180] sm:$0xff]
    %v226 = vld [vmem:[#allocation9 + $0x188] sm:$0xff]
    %v227 = vld [vmem:[#allocation9 + $0x190] sm:$0xff]
    %v228 = vld [vmem:[#allocation9 + $0x198] sm:$0xff]
    %v229 = vld [vmem:[#allocation9 + $0x1a0] sm:$0xff]
    %v230 = vld [vmem:[#allocation9 + $0x1a8] sm:$0xff]
    %v231 = vld [vmem:[#allocation9 + $0x1b0] sm:$0xff]
    %v232 = vld [vmem:[#allocation9 + $0x1b8] sm:$0xff]
    %v233 = vld [vmem:[#allocation9 + $0x1c0] sm:$0xff]
    %v234 = vld [vmem:[#allocation9 + $0x1c8] sm:$0xff]
    %v235 = vld [vmem:[#allocation9 + $0x1d0] sm:$0xff]
    %v236 = vld [vmem:[#allocation9 + $0x1d8] sm:$0xff]
    %v237 = vld [vmem:[#allocation9 + $0x1e0] sm:$0xff]
    %v238 = vld [vmem:[#allocation9 + $0x1e8] sm:$0xff]
    %v239 = vld [vmem:[#allocation9 + $0x1f0] sm:$0xff]
    %v240 = vld [vmem:[#allocation9 + $0x1f8] sm:$0xff]
    %v241 = vld [vmem:[%s5] sm:$0x3]
    %v243 = vlaneseq
    %v244 = vshrl.u32 %v243, 7
    %v245 = vsub.s32 0, %v244
    %v246 = vrot.slane %v241, %v245
    %v247 = vlaneseq
    %v248 = vshrl.u32 %v247, 7
    %v249 = vsub.s32 1, %v248
    %v250 = vrot.slane %v241, %v249
    %253 = vmatprep.subr.mxu0 %v178
    %254 = vmatpush1.msra.mxu0 %v177
    %255 = vmatprep.subr.mxu0 %v180
    %256 = vmatpush1.msra.mxu0 %v179
    %257 = vmatprep.subr.mxu0 %v182
    %258 = vmatpush1.msra.mxu0 %v181
    %259 = vmatprep.subr.mxu0 %v184
    %260 = vmatpush1.msra.mxu0 %v183
    %261 = vmatprep.subr.mxu0 %v186
    %262 = vmatpush1.msra.mxu0 %v185
    %263 = vmatprep.subr.mxu0 %v188
    %264 = vmatpush1.msra.mxu0 %v187
    %265 = vmatprep.subr.mxu0 %v190
    %266 = vmatpush1.msra.mxu0 %v189
    %267 = vmatprep.subr.mxu0 %v192
    %268 = vmatpush1.msra.mxu0 %v191
    %269 = vmatprep.subr.mxu0 %v194
    %270 = vmatpush1.msra.mxu0 %v193
    %271 = vmatprep.subr.mxu0 %v196
    %272 = vmatpush1.msra.mxu0 %v195
    %273 = vmatprep.subr.mxu0 %v198
    %274 = vmatpush1.msra.mxu0 %v197
    %275 = vmatprep.subr.mxu0 %v200
    %276 = vmatpush1.msra.mxu0 %v199
    %277 = vmatprep.subr.mxu0 %v202
    %278 = vmatpush1.msra.mxu0 %v201
    %279 = vmatprep.subr.mxu0 %v204
    %280 = vmatpush1.msra.mxu0 %v203
    %281 = vmatprep.subr.mxu0 %v206
    %282 = vmatpush1.msra.mxu0 %v205
    %283 = vmatprep.subr.mxu0 %v208
    %284 = vmatpush1.msra.mxu0 %v207
    %285 = vmatprep.subr.mxu0 %v210
    %286 = vmatpush1.msra.mxu0 %v209
    %287 = vmatprep.subr.mxu0 %v212
    %288 = vmatpush1.msra.mxu0 %v211
    %289 = vmatprep.subr.mxu0 %v214
    %290 = vmatpush1.msra.mxu0 %v213
    %291 = vmatprep.subr.mxu0 %v216
    %292 = vmatpush1.msra.mxu0 %v215
    %293 = vmatprep.subr.mxu0 %v218
    %294 = vmatpush1.msra.mxu0 %v217
    %295 = vmatprep.subr.mxu0 %v220
    %296 = vmatpush1.msra.mxu0 %v219
    %297 = vmatprep.subr.mxu0 %v222
    %298 = vmatpush1.msra.mxu0 %v221
    %299 = vmatprep.subr.mxu0 %v224
    %300 = vmatpush1.msra.mxu0 %v223
    %301 = vmatprep.subr.mxu0 %v226
    %302 = vmatpush1.msra.mxu0 %v225
    %303 = vmatprep.subr.mxu0 %v228
    %304 = vmatpush1.msra.mxu0 %v227
    %305 = vmatprep.subr.mxu0 %v230
    %306 = vmatpush1.msra.mxu0 %v229
    %307 = vmatprep.subr.mxu0 %v232
    %308 = vmatpush1.msra.mxu0 %v231
    %309 = vmatprep.subr.mxu0 %v234
    %310 = vmatpush1.msra.mxu0 %v233
    %311 = vmatprep.subr.mxu0 %v236
    %312 = vmatpush1.msra.mxu0 %v235
    %313 = vmatprep.subr.mxu0 %v238
    %314 = vmatpush1.msra.mxu0 %v237
    %315 = vmatprep.subr.mxu0 %v240
    %316 = vmatpush1.msra.mxu0 %v239
    %317 = vmatprep.mubr.f32.mxu0 %v174
    %318 = vmatmul.mubr.f32.gmra.mrb[0].mxu0 %v173
    %v319 = vpop.f32.mrb[0].mxu0
    %v320 = vadd.f32 %v246, %v319
    %v321 = vpop.f32.mrb[0].mxu0
    %v322 = vadd.f32 %v250, %v321
    %323 = vmatprep.mubr.f32.mxu0 %v176
    %324 = vmatmul.mubr.f32.gmra.mrb[0].mxu0 %v175
    %v325 = vpop.f32.mrb[0].mxu0
    %v326 = vadd.f32 %v246, %v325
    %v327 = vpop.f32.mrb[0].mxu0
    %v328 = vadd.f32 %v250, %v327
    %329 = vdwg.mxu0
    %v330 = vmax.f32 %v320, 0.0
    %v331 = vmax.f32 %v322, 0.0
    %v332 = vmax.f32 %v326, 0.0
    %v333 = vmax.f32 %v328, 0.0
    %334 = vst [vmem:[#allocation10] sm:$0xff] %v330
    %335 = vst [vmem:[#allocation10 + $0x8] sm:$0xff] %v331
    %336 = vst [vmem:[#allocation10 + $0x10] sm:$0xff] %v332
    %337 = vst [vmem:[#allocation10 + $0x18] sm:$0xff] %v333
    // Predicated region
    $region34: #{tpu_custom_call.1} parent=1 // pred_check
      _
    $region35: #{tpu_custom_call.1} parent=1 // pred_check_branch
      %339 = sbr.rel (0) target = $region37
    $region36: #{tpu_custom_call.1} parent=1 // pred_region
      %s341 = ssub.s32 512, 512
      %342 = vsyncadd [#allocation6], %s341
      %s343 = sshll.u32 [#allocation10], 4
      %s344 = int_to_ptr.vmem [resolvable:$true] %s343
      %349 = dma.vmem_to_hbm [thread:$0]  %s344, 512, %s6, [#allocation6], 256, 256, 16
    $region37: #{tpu_custom_call.1} parent=1 // pred_fallthru
      _
    // Predicated region
    $region38: #{tpu_custom_call.1} parent=1 // pred_check
      _
    $region39: #{tpu_custom_call.1} parent=1 // pred_check_branch
      %351 = sbr.rel (0) target = $region41
    $region40: #{tpu_custom_call.1} parent=1 // pred_region
      %352 = dma.done [#allocation6], 512
    $region41: #{tpu_custom_call.1} parent=1 // pred_fallthru
      _
    %353 = vsyncpa [#allocation5], 1
    %354 = vsyncpa [#allocation8], 1
    %355 = vsyncpa [#allocation6], 1

</llo_original>
